<compile_context>
chip_gen: v7x
topology: tpu7x:2x2x1
jax: 0.10.0
libtpu: 0.0.40
codegen_flags: <defaults>
</compile_context>

<pallas_src>
import jax
import jax.numpy as jnp
from jax import lax
from jax.experimental import pallas as pl
from jax.experimental.pallas import tpu as pltpu
import numpy as np

PAD_IDX = 1          # OpenNMT-style padding index in the target vocab
EPS = 1e20           # module's eps; logits[:, :, PAD_IDX] = -eps


def _round_up(x, m):
    return ((x + m - 1) // m) * m


# --------------------------------------------------------------------------- kernel

def _build_kernel(tm, tn, nv):
    """Kernel body with tile sizes baked in (static slice widths / loop bounds)."""

    def kernel(hid_ref, attn_ref, smap_ref, w_ref, b_ref, wc_ref, bc_ref,
               outp_ref, copy_ref,
               m_run_ref, l_run_ref, pcopy_ref, m_tile_ref):
        v = pl.program_id(2)
        h = hid_ref[0]                                           # (TM, D) bf16

        # ---- first V step: init online stats + do the whole copy branch ----
        @pl.when(v == 0)
        def _():
            m_run_ref[...] = jnp.full((tm, 1), -jnp.inf, jnp.float32)
            l_run_ref[...] = jnp.zeros((tm, 1), jnp.float32)
            # Copy switch on the VPU/XLU (avoids an N=1 MXU matmul); all f32.
            h32 = h.astype(jnp.float32)
            clogit = jnp.sum(h32 * wc_ref[...], axis=-1, keepdims=True) + bc_ref[...]
            p_copy = jax.nn.sigmoid(clogit)                      # (TM, 1) f32
            pcopy_ref[...] = p_copy
            # copy_prob = (attn @ src_map) * p_copy : p_copy factored out of the MXU
            # matmul so the scaling is exact f32 on the accumulator.
            copy_ref[0] = jnp.dot(attn_ref[0], smap_ref[0],
                                  preferred_element_type=jnp.float32) * p_copy

        # ---- streamed generator tile: logits -> locally normalized exp ----
        logit = jnp.dot(h, w_ref[...],
                        preferred_element_type=jnp.float32) + b_ref[...]
        m_t = jnp.max(logit, axis=-1, keepdims=True)             # (TM, 1)
        p_t = jnp.exp(logit - m_t)                               # (TM, TN); PAD col -> 0
        s_t = jnp.sum(p_t, axis=-1, keepdims=True)               # (TM, 1)

        start = pl.multiple_of(v * tn, 128)
        outp_ref[0, :, pl.ds(start, tn)] = p_t                   # lane-dense staging store
        m_tile_ref[v] = m_t                                      # per-tile max for finalize

        m_old = m_run_ref[...]
        m_new = jnp.maximum(m_old, m_t)
        l_run_ref[...] = (l_run_ref[...] * jnp.exp(m_old - m_new)
                          + s_t * jnp.exp(m_t - m_new))
        m_run_ref[...] = m_new

        # ---- last V step: cheap per-tile rescale (VPU multiplies only) ----
        @pl.when(v == nv - 1)
        def _():
            m_fin = m_run_ref[...]
            inv_l = pl.reciprocal(l_run_ref[...], approx=True)
            base = inv_l * (1.0 - pcopy_ref[...])                # (TM, 1)

            def rescale(i, st):
                c = jnp.exp(m_tile_ref[i] - m_fin) * base        # (TM, 1)
                sl = pl.ds(st, tn)
                outp_ref[0, :, sl] = outp_ref[0, :, sl] * c

            if nv <= 8:                                          # static unroll (small NV)
                for i in range(nv):
                    rescale(i, i * tn)
            else:
                def body(i, carry):
                    rescale(i, pl.multiple_of(i * tn, 128))
                    return carry
                lax.fori_loop(0, nv, body, 0)

    return kernel


# ----------------------------------------------------------------- tile / VMEM picking

def _vmem_budget_bytes():
    """Generation-aware VMEM budget (v7x: ~48 MiB, v5e/v6e: ~100 MiB)."""
    try:
        phys = int(pltpu.get_tpu_info().vmem_capacity_bytes)
    except Exception:
        phys = 64 * 1024 * 1024      # conservative (v7x-sized) fallback
    return max(32 * 1024 * 1024, min(phys - 16 * 1024 * 1024, 100 * 1024 * 1024))


def _estimate_vmem_bytes(tm, tn, nv, D, S, Cp, Vp):
    f32, bf16, nbuf = 4, 2, 2
    p8 = lambda x: _round_up(x, 8)
    p128 = lambda x: _round_up(x, 128)
    total = 0
    total += nbuf * tm * Vp * f32              # resident out_prob block
    total += nbuf * tm * Cp * f32              # copy_prob block
    total += nbuf * p8(tm) * p128(D) * bf16    # hidden tile
    total += nbuf * p8(tm) * p128(S) * bf16    # attn tile
    total += nbuf * p8(S) * Cp * bf16          # src_map
    total += nbuf * p8(D) * tn * bf16          # w_gen tile
    total += nbuf * 8 * tn * f32               # b_gen tile
    total += nbuf * 8 * p128(D) * f32          # w_copy row
    total += nbuf * 8 * 128 * f32              # b_copy
    total += 3 * tm * 128 * f32                # m_run / l_run / p_copy scratch
    total += nv * tm * 128 * f32               # per-V-tile max scratch
    return total


def _choose_tn(Vp, D):
    # Large TN amortizes the ~0.35us/grid-step overhead, but keep each streamed
    # w_gen buffer around <=4 MiB.
    limit = max(128, (4 << 20) // max(_round_up(D, 8) * 2, 1))
    for cand in (2048, 1024, 512, 256, 128):
        if Vp % cand == 0 and cand <= limit:
            return cand
    for cand in (2048, 1024, 512, 256, 128):
        if Vp % cand == 0:
            return cand
    return Vp


def _choose_tiles(B, Tp, D, S, Cp, Vp, budget):
    tn = _choose_tn(Vp, D)
    nv = Vp // tn
    tm_cands = [c for c in (512, 256, 128, 64, 32, 16, 8) if Tp % c == 0]
    tm = tm_cands[-1]
    for cand in tm_cands:                       # largest TM that fits the VMEM budget
        if _estimate_vmem_bytes(cand, tn, nv, D, S, Cp, Vp) <= budget:
            tm = cand
            break
    # v7x has 2 TensorCores: make sure the "parallel" grid axes expose >= 2 supertiles.
    if B * (Tp // tm) < 2:
        for cand in tm_cands:
            if cand < tm and B * (Tp // cand) >= 2:
                tm = cand
                break
    return tm, tn, nv


# ----------------------------------------------------------------------------- wrapper

def copy_generator(hidden, attn, src_map, w_gen, b_gen, w_copy, b_copy):
    """
    hidden : (B, T, D)   attn: (B, T, S)   src_map: (B, S, C)
    w_gen  : (D, V)  b_gen: (V,)   (already transposed from torch (V, D))
    w_copy : (D, 1)  b_copy: (1,)
    returns (B, T, V + C)
    """
    B, T, D = hidden.shape
    S = attn.shape[2]
    C = src_map.shape[2]
    V = w_gen.shape[1]

    # Host-side padding: lane-dense stores, no degenerate single-tile fallback.
    Vp = _round_up(V, 128)
    Cp = _round_up(C, 128)
    Tp = _round_up(T, 16)          # bf16 sublane packing

    budget = _vmem_budget_bytes()
    TM, TN, NV = _choose_tiles(B, Tp, D, S, Cp, Vp, budget)
    vmem_limit = int(budget)

    # Fold PAD mask + vocab padding into the bias: -1e20 -> probability 0.
    b_full = jnp.full((Vp,), -EPS, jnp.float32)
    b_full = b_full.at[:V].set(jnp.asarray(b_gen, jnp.float32))
    b_full = b_full.at[PAD_IDX].set(-EPS).reshape(1, Vp)

    w_full = jnp.zeros((D, Vp), jnp.bfloat16).at[:, :V].set(w_gen.astype(jnp.bfloat16))
    smap_p = jnp.zeros((B, S, Cp), jnp.bfloat16).at[:, :, :C].set(src_map.astype(jnp.bfloat16))
    hid_p = jnp.zeros((B, Tp, D), jnp.bfloat16).at[:, :T, :].set(hidden.astype(jnp.bfloat16))
    attn_p = jnp.zeros((B, Tp, S), jnp.bfloat16).at[:, :T, :].set(attn.astype(jnp.bfloat16))
    wc_row = jnp.asarray(w_copy, jnp.float32).reshape(1, D)      # (D,1) -> (1,D), f32
    bc = jnp.asarray(b_copy, jnp.float32).reshape(1, 1)

    grid = (B, Tp // TM, NV)
    kernel = _build_kernel(TM, TN, NV)

    out_prob, copy_prob = pl.pallas_call(
        kernel,
        out_shape=(jax.ShapeDtypeStruct((B, Tp, Vp), jnp.float32),
                   jax.ShapeDtypeStruct((B, Tp, Cp), jnp.float32)),
        grid_spec=pltpu.PrefetchScalarGridSpec(
            num_scalar_prefetch=0,
            grid=grid,
            in_specs=[
                pl.BlockSpec((1, TM, D), lambda b, t, v: (b, t, 0)),    # hidden
                pl.BlockSpec((1, TM, S), lambda b, t, v: (b, t, 0)),    # attn
                pl.BlockSpec((1, S, Cp), lambda b, t, v: (b, 0, 0)),    # src_map
                pl.BlockSpec((D, TN),    lambda b, t, v: (0, v)),       # w_gen tile
                pl.BlockSpec((1, TN),    lambda b, t, v: (0, v)),       # b_gen tile
                pl.BlockSpec((1, D),     lambda b, t, v: (0, 0)),       # w_copy row
                pl.BlockSpec((1, 1),     lambda b, t, v: (0, 0)),       # b_copy
            ],
            out_specs=[
                # out_prob block is resident across the V axis (staging + rescale)
                pl.BlockSpec((1, TM, Vp), lambda b, t, v: (b, t, 0)),
                pl.BlockSpec((1, TM, Cp), lambda b, t, v: (b, t, 0)),
            ],
            scratch_shapes=[
                pltpu.VMEM((TM, 1), jnp.float32),      # running max
                pltpu.VMEM((TM, 1), jnp.float32),      # running exp-sum
                pltpu.VMEM((TM, 1), jnp.float32),      # p_copy
                pltpu.VMEM((NV, TM, 1), jnp.float32),  # per-V-tile max
            ]),
        compiler_params=pltpu.CompilerParams(
            dimension_semantics=("parallel", "parallel", "arbitrary"),
            vmem_limit_bytes=vmem_limit),
    )(hid_p, attn_p, smap_p, w_full, b_full, wc_row, bc)

    # Strip padding and concatenate outside the kernel (keeps kernel stores lane-dense).
    return jnp.concatenate([out_prob[:, :T, :V], copy_prob[:, :T, :C]], axis=-1)


# --------------------------------------------------------------------------- reference

def copy_generator_ref(hidden, attn, src_map, w_gen, b_gen, w_copy, b_copy):
    """Plain-JAX reference mirroring the PyTorch forward."""
    logits = jnp.einsum("btd,dv->btv", hidden, w_gen) + b_gen
    logits = logits.at[:, :, PAD_IDX].set(-EPS)
    prob = jax.nn.softmax(logits, axis=-1)
    p_copy = jax.nn.sigmoid(jnp.einsum("btd,do->bto", hidden, w_copy) + b_copy)
    out_prob = prob * (1.0 - p_copy)
    copy_prob = jnp.matmul(attn * p_copy, src_map)
    return jnp.concatenate([out_prob, copy_prob], axis=2)


if __name__ == "__main__":
    # Small shapes consistent with the module's forward.
    B, T, D = 2, 8, 32          # batch, target length, input_size
    S, V, C = 16, 128, 128      # source length, tgt vocab, extended (copy) vocab

    key = jax.random.PRNGKey(0)
    k1, k2, k3, k4, k5, k6, k7 = jax.random.split(key, 7)

    hidden = jax.random.normal(k1, (B, T, D), dtype=jnp.float32)
    # attn: a valid attention distribution over source positions
    attn = jax.nn.softmax(jax.random.normal(k2, (B, T, S), dtype=jnp.float32), axis=-1)
    # src_map: sparse indicator matrix mapping each source word -> extended vocab index
    src_idx = jax.random.randint(k3, (B, S), 0, C)
    src_map = jax.nn.one_hot(src_idx, C, dtype=jnp.float32)

    # Parameters (deterministic init). Torch Linear weight (out, in) -> store (in, out).
    w_gen = 0.1 * jax.random.normal(k4, (D, V), dtype=jnp.float32)
    b_gen = 0.1 * jax.random.normal(k5, (V,), dtype=jnp.float32)
    w_copy = 0.1 * jax.random.normal(k6, (D, 1), dtype=jnp.float32)
    b_copy = 0.1 * jax.random.normal(k7, (1,), dtype=jnp.float32)

    out = jax.block_until_ready(
        copy_generator(hidden, attn, src_map, w_gen, b_gen, w_copy, b_copy))
    ref = copy_generator_ref(hidden, attn, src_map, w_gen, b_gen, w_copy, b_copy)

    assert out.shape == (B, T, V + C), out.shape
    # Tightened vs previous revision: p_copy stays f32 and is applied as an exact
    # f32 scaling; remaining error is bf16 inputs + approx reciprocal.
    np.testing.assert_allclose(np.asarray(out), np.asarray(ref), rtol=1e-2, atol=1e-3)

    print("KERNEL_OK")
</pallas_src>

<mosaic_0001>
module attributes {stable_mosaic.version = 11 : i64} {
  func.func @kernel(%arg0: i32, %arg1: i32, %arg2: i32, %arg3: memref<1x16x32xbf16, #tpu.memory_space<vmem>>, %arg4: memref<1x16x16xbf16, #tpu.memory_space<vmem>>, %arg5: memref<1x16x128xbf16, #tpu.memory_space<vmem>>, %arg6: memref<32x128xbf16, #tpu.memory_space<vmem>>, %arg7: memref<1x128xf32, #tpu.memory_space<vmem>>, %arg8: memref<1x32xf32, #tpu.memory_space<vmem>>, %arg9: memref<1x1xf32, #tpu.memory_space<vmem>>, %arg10: memref<1x16x128xf32, #tpu.memory_space<vmem>>, %arg11: memref<1x16x128xf32, #tpu.memory_space<vmem>>, %arg12: memref<16x1xf32, #tpu.memory_space<vmem>>, %arg13: memref<16x1xf32, #tpu.memory_space<vmem>>, %arg14: memref<16x1xf32, #tpu.memory_space<vmem>>, %arg15: memref<1x16x1xf32, #tpu.memory_space<vmem>>) attributes {dimension_semantics = [#tpu.dimension_semantics<parallel>, #tpu.dimension_semantics<parallel>, #tpu.dimension_semantics<arbitrary>], iteration_bounds = array<i64: 2, 1, 1>, scalar_prefetch = 0 : i64, scratch_operands = 4 : i64, tpu.core_type = #tpu.core_type<tc>, window_params = [{transform_indices = @transform_0, window_bounds = array<i64: 1, 16, 32>}, {transform_indices = @transform_1, window_bounds = array<i64: 1, 16, 16>}, {transform_indices = @transform_2, window_bounds = array<i64: 1, 16, 128>}, {transform_indices = @transform_3, window_bounds = array<i64: 32, 128>}, {transform_indices = @transform_4, window_bounds = array<i64: 1, 128>}, {pipeline_mode = #tpu.pipeline_mode<synchronous>, transform_indices = @transform_5, window_bounds = array<i64: 1, 32>}, {pipeline_mode = #tpu.pipeline_mode<synchronous>, transform_indices = @transform_6, window_bounds = array<i64: 1, 1>}, {transform_indices = @transform_7, window_bounds = array<i64: 1, 16, 128>}, {transform_indices = @transform_8, window_bounds = array<i64: 1, 16, 128>}]} {
    %c0 = arith.constant 0 : index
    %c0_0 = arith.constant 0 : index
    %c0_1 = arith.constant 0 : index
    %0 = vector.load %arg3[%c0, %c0_0, %c0_1] : memref<1x16x32xbf16, #tpu.memory_space<vmem>>, vector<1x16x32xbf16>
    %1 = vector.shape_cast %0 : vector<1x16x32xbf16> to vector<16x32xbf16>
    %c0_i32 = arith.constant 0 : i32
    %2 = arith.cmpi eq, %arg2, %c0_i32 : i32
    %3 = arith.extui %2 : i1 to i32
    %c0_i32_2 = arith.constant 0 : i32
    %4 = arith.cmpi ne, %3, %c0_i32_2 : i32
    scf.if %4 {
      %cst_23 = arith.constant 0xFF800000 : f32
      %42 = vector.broadcast %cst_23 : f32 to vector<16x1xf32>
      %c0_24 = arith.constant 0 : index
      %c0_25 = arith.constant 0 : index
      %43 = vector.load %arg12[%c0_24, %c0_25] : memref<16x1xf32, #tpu.memory_space<vmem>>, vector<16x1xf32>
      tpu.vector_store %arg12[%c0_24, %c0_25], %42 {strides = array<i32>} : memref<16x1xf32, #tpu.memory_space<vmem>>, vector<16x1xf32>,
      %cst_26 = arith.constant 0.000000e+00 : f32
      %44 = vector.broadcast %cst_26 : f32 to vector<16x1xf32>
      %c0_27 = arith.constant 0 : index
      %c0_28 = arith.constant 0 : index
      %45 = vector.load %arg13[%c0_27, %c0_28] : memref<16x1xf32, #tpu.memory_space<vmem>>, vector<16x1xf32>
      tpu.vector_store %arg13[%c0_27, %c0_28], %44 {strides = array<i32>} : memref<16x1xf32, #tpu.memory_space<vmem>>, vector<16x1xf32>,
      %46 = arith.extf %1 : vector<16x32xbf16> to vector<16x32xf32>
      %c0_29 = arith.constant 0 : index
      %c0_30 = arith.constant 0 : index
      %47 = vector.load %arg8[%c0_29, %c0_30] : memref<1x32xf32, #tpu.memory_space<vmem>>, vector<1x32xf32>
      %48 = vector.broadcast %47 : vector<1x32xf32> to vector<16x32xf32>
      %49 = arith.mulf %46, %48 : vector<16x32xf32>
      %cst_31 = arith.constant dense<0.000000e+00> : vector<16xf32>
      %50 = vector.multi_reduction <add>, %49, %cst_31 [1] : vector<16x32xf32> to vector<16xf32>
      %51 = vector.shape_cast %50 : vector<16xf32> to vector<16x1xf32>
      %c0_32 = arith.constant 0 : index
      %c0_33 = arith.constant 0 : index
      %52 = vector.load %arg9[%c0_32, %c0_33] : memref<1x1xf32, #tpu.memory_space<vmem>>, vector<1x1xf32>
      %53 = vector.broadcast %52 : vector<1x1xf32> to vector<16x1xf32>
      %54 = arith.addf %51, %53 : vector<16x1xf32>
      %55 = arith.negf %54 : vector<16x1xf32>
      %56 = math.exp %55 : vector<16x1xf32>
      %cst_34 = arith.constant 1.000000e+00 : f32
      %57 = vector.broadcast %cst_34 : f32 to vector<16x1xf32>
      %58 = arith.addf %57, %56 : vector<16x1xf32>
      %59 = arith.divf %57, %58 : vector<16x1xf32>
      %c0_35 = arith.constant 0 : index
      %c0_36 = arith.constant 0 : index
      %60 = vector.load %arg14[%c0_35, %c0_36] : memref<16x1xf32, #tpu.memory_space<vmem>>, vector<16x1xf32>
      tpu.vector_store %arg14[%c0_35, %c0_36], %59 {strides = array<i32>} : memref<16x1xf32, #tpu.memory_space<vmem>>, vector<16x1xf32>,
      %c0_37 = arith.constant 0 : index
      %c0_38 = arith.constant 0 : index
      %c0_39 = arith.constant 0 : index
      %61 = vector.load %arg4[%c0_37, %c0_38, %c0_39] : memref<1x16x16xbf16, #tpu.memory_space<vmem>>, vector<1x16x16xbf16>
      %62 = vector.shape_cast %61 : vector<1x16x16xbf16> to vector<16x16xbf16>
      %c0_40 = arith.constant 0 : index
      %c0_41 = arith.constant 0 : index
      %c0_42 = arith.constant 0 : index
      %63 = vector.load %arg5[%c0_40, %c0_41, %c0_42] : memref<1x16x128xbf16, #tpu.memory_space<vmem>>, vector<1x16x128xbf16>
      %64 = vector.shape_cast %63 : vector<1x16x128xbf16> to vector<16x128xbf16>
      %cst_43 = arith.constant dense<0.000000e+00> : vector<16x128xf32>
      %65 = tpu.matmul %62, %64, %cst_43 {dimension_numbers = #tpu.dot_dimension_numbers<[1], [0], [0], [1], [0, 0, 1, 1], [], []>} : vector<16x16xbf16>, vector<16x128xbf16>, vector<16x128xf32> -> vector<16x128xf32>
      %66 = vector.broadcast %59 : vector<16x1xf32> to vector<16x128xf32>
      %67 = arith.mulf %65, %66 : vector<16x128xf32>
      %c0_44 = arith.constant 0 : index
      %c0_45 = arith.constant 0 : index
      %c0_46 = arith.constant 0 : index
      %68 = vector.load %arg11[%c0_44, %c0_45, %c0_46] : memref<1x16x128xf32, #tpu.memory_space<vmem>>, vector<1x16x128xf32>
      %69 = vector.shape_cast %68 : vector<1x16x128xf32> to vector<16x128xf32>
      %70 = vector.shape_cast %67 : vector<16x128xf32> to vector<1x16x128xf32>
      tpu.vector_store %arg11[%c0_44, %c0_45, %c0_46], %70 {strides = array<i32>} : memref<1x16x128xf32, #tpu.memory_space<vmem>>, vector<1x16x128xf32>,
    } else {
    }
    %c0_3 = arith.constant 0 : index
    %c0_4 = arith.constant 0 : index
    %5 = vector.load %arg6[%c0_3, %c0_4] : memref<32x128xbf16, #tpu.memory_space<vmem>>, vector<32x128xbf16>
    %cst = arith.constant dense<0.000000e+00> : vector<16x128xf32>
    %6 = tpu.matmul %1, %5, %cst {dimension_numbers = #tpu.dot_dimension_numbers<[1], [0], [0], [1], [0, 0, 1, 1], [], []>} : vector<16x32xbf16>, vector<32x128xbf16>, vector<16x128xf32> -> vector<16x128xf32>
    %c0_5 = arith.constant 0 : index
    %c0_6 = arith.constant 0 : index
    %7 = vector.load %arg7[%c0_5, %c0_6] : memref<1x128xf32, #tpu.memory_space<vmem>>, vector<1x128xf32>
    %8 = vector.broadcast %7 : vector<1x128xf32> to vector<16x128xf32>
    %9 = arith.addf %6, %8 : vector<16x128xf32>
    %cst_7 = arith.constant dense<0xFF800000> : vector<16xf32>
    %10 = vector.multi_reduction <maximumf>, %9, %cst_7 [1] : vector<16x128xf32> to vector<16xf32>
    %11 = vector.shape_cast %10 : vector<16xf32> to vector<16x1xf32>
    %12 = vector.broadcast %11 : vector<16x1xf32> to vector<16x128xf32>
    %13 = arith.subf %9, %12 : vector<16x128xf32>
    %14 = math.exp %13 : vector<16x128xf32>
    %cst_8 = arith.constant dense<0.000000e+00> : vector<16xf32>
    %15 = vector.multi_reduction <add>, %14, %cst_8 [1] : vector<16x128xf32> to vector<16xf32>
    %16 = vector.shape_cast %15 : vector<16xf32> to vector<16x1xf32>
    %c128_i32 = arith.constant 128 : i32
    %17 = arith.muli %arg2, %c128_i32 : i32
    %18 = tpu.assume_multiple %17, 128 : i32
    %c0_9 = arith.constant 0 : index
    %c0_10 = arith.constant 0 : index
    %19 = arith.index_cast %18 : i32 to index
    %20 = vector.load %arg10[%c0_9, %c0_10, %19] : memref<1x16x128xf32, #tpu.memory_space<vmem>>, vector<1x16x128xf32>
    %21 = vector.shape_cast %20 : vector<1x16x128xf32> to vector<16x128xf32>
    %22 = vector.shape_cast %14 : vector<16x128xf32> to vector<1x16x128xf32>
    tpu.vector_store %arg10[%c0_9, %c0_10, %19], %22 {strides = array<i32>} : memref<1x16x128xf32, #tpu.memory_space<vmem>>, vector<1x16x128xf32>,
    %23 = arith.index_cast %arg2 : i32 to index
    %c0_11 = arith.constant 0 : index
    %c0_12 = arith.constant 0 : index
    %24 = vector.load %arg15[%23, %c0_11, %c0_12] : memref<1x16x1xf32, #tpu.memory_space<vmem>>, vector<1x16x1xf32>
    %25 = vector.shape_cast %24 : vector<1x16x1xf32> to vector<16x1xf32>
    %26 = vector.shape_cast %11 : vector<16x1xf32> to vector<1x16x1xf32>
    tpu.vector_store %arg15[%23, %c0_11, %c0_12], %26 {strides = array<i32>} : memref<1x16x1xf32, #tpu.memory_space<vmem>>, vector<1x16x1xf32>,
    %c0_13 = arith.constant 0 : index
    %c0_14 = arith.constant 0 : index
    %27 = vector.load %arg12[%c0_13, %c0_14] : memref<16x1xf32, #tpu.memory_space<vmem>>, vector<16x1xf32>
    %28 = arith.maximumf %27, %11 : vector<16x1xf32>
    %c0_15 = arith.constant 0 : index
    %c0_16 = arith.constant 0 : index
    %29 = vector.load %arg13[%c0_15, %c0_16] : memref<16x1xf32, #tpu.memory_space<vmem>>, vector<16x1xf32>
    %30 = arith.subf %27, %28 : vector<16x1xf32>
    %31 = math.exp %30 : vector<16x1xf32>
    %32 = arith.mulf %29, %31 : vector<16x1xf32>
    %33 = arith.subf %11, %28 : vector<16x1xf32>
    %34 = math.exp %33 : vector<16x1xf32>
    %35 = arith.mulf %16, %34 : vector<16x1xf32>
    %36 = arith.addf %32, %35 : vector<16x1xf32>
    %c0_17 = arith.constant 0 : index
    %c0_18 = arith.constant 0 : index
    %37 = vector.load %arg13[%c0_17, %c0_18] : memref<16x1xf32, #tpu.memory_space<vmem>>, vector<16x1xf32>
    tpu.vector_store %arg13[%c0_17, %c0_18], %36 {strides = array<i32>} : memref<16x1xf32, #tpu.memory_space<vmem>>, vector<16x1xf32>,
    %c0_19 = arith.constant 0 : index
    %c0_20 = arith.constant 0 : index
    %38 = vector.load %arg12[%c0_19, %c0_20] : memref<16x1xf32, #tpu.memory_space<vmem>>, vector<16x1xf32>
    tpu.vector_store %arg12[%c0_19, %c0_20], %28 {strides = array<i32>} : memref<16x1xf32, #tpu.memory_space<vmem>>, vector<16x1xf32>,
    %c0_i32_21 = arith.constant 0 : i32
    %39 = arith.cmpi eq, %arg2, %c0_i32_21 : i32
    %40 = arith.extui %39 : i1 to i32
    %c0_i32_22 = arith.constant 0 : i32
    %41 = arith.cmpi ne, %40, %c0_i32_22 : i32
    scf.if %41 {
      %c0_23 = arith.constant 0 : index
      %c0_24 = arith.constant 0 : index
      %42 = vector.load %arg12[%c0_23, %c0_24] : memref<16x1xf32, #tpu.memory_space<vmem>>, vector<16x1xf32>
      %c0_25 = arith.constant 0 : index
      %c0_26 = arith.constant 0 : index
      %43 = vector.load %arg13[%c0_25, %c0_26] : memref<16x1xf32, #tpu.memory_space<vmem>>, vector<16x1xf32>
      %44 = tpu.reciprocal %43 {approx = true} : vector<16x1xf32> -> vector<16x1xf32>
      %c0_27 = arith.constant 0 : index
      %c0_28 = arith.constant 0 : index
      %45 = vector.load %arg14[%c0_27, %c0_28] : memref<16x1xf32, #tpu.memory_space<vmem>>, vector<16x1xf32>
      %cst_29 = arith.constant 1.000000e+00 : f32
      %46 = vector.broadcast %cst_29 : f32 to vector<16x1xf32>
      %47 = arith.subf %46, %45 : vector<16x1xf32>
      %48 = arith.mulf %44, %47 : vector<16x1xf32>
      %c0_30 = arith.constant 0 : index
      %c0_31 = arith.constant 0 : index
      %c0_32 = arith.constant 0 : index
      %49 = vector.load %arg15[%c0_30, %c0_31, %c0_32] : memref<1x16x1xf32, #tpu.memory_space<vmem>>, vector<1x16x1xf32>
      %50 = vector.shape_cast %49 : vector<1x16x1xf32> to vector<16x1xf32>
      %51 = arith.subf %50, %42 : vector<16x1xf32>
      %52 = math.exp %51 : vector<16x1xf32>
      %53 = arith.mulf %52, %48 : vector<16x1xf32>
      %c0_33 = arith.constant 0 : index
      %c0_34 = arith.constant 0 : index
      %c0_35 = arith.constant 0 : index
      %54 = vector.load %arg10[%c0_33, %c0_34, %c0_35] : memref<1x16x128xf32, #tpu.memory_space<vmem>>, vector<1x16x128xf32>
      %55 = vector.shape_cast %54 : vector<1x16x128xf32> to vector<16x128xf32>
      %56 = vector.broadcast %53 : vector<16x1xf32> to vector<16x128xf32>
      %57 = arith.mulf %55, %56 : vector<16x128xf32>
      %c0_36 = arith.constant 0 : index
      %c0_37 = arith.constant 0 : index
      %c0_38 = arith.constant 0 : index
      %58 = vector.load %arg10[%c0_36, %c0_37, %c0_38] : memref<1x16x128xf32, #tpu.memory_space<vmem>>, vector<1x16x128xf32>
      %59 = vector.shape_cast %58 : vector<1x16x128xf32> to vector<16x128xf32>
      %60 = vector.shape_cast %57 : vector<16x128xf32> to vector<1x16x128xf32>
      tpu.vector_store %arg10[%c0_36, %c0_37, %c0_38], %60 {strides = array<i32>} : memref<1x16x128xf32, #tpu.memory_space<vmem>>, vector<1x16x128xf32>,
    } else {
    }
    return
  }
  func.func @transform_0(%arg0: i32, %arg1: i32, %arg2: i32) -> (i32, i32, i32) {
    %c0_i32 = arith.constant 0 : i32
    %c0_i32_0 = arith.constant 0 : i32
    return %arg0, %arg1, %c0_i32 : i32, i32, i32
  }
  func.func @transform_1(%arg0: i32, %arg1: i32, %arg2: i32) -> (i32, i32, i32) {
    %c0_i32 = arith.constant 0 : i32
    %c0_i32_0 = arith.constant 0 : i32
    return %arg0, %arg1, %c0_i32 : i32, i32, i32
  }
  func.func @transform_2(%arg0: i32, %arg1: i32, %arg2: i32) -> (i32, i32, i32) {
    %c0_i32 = arith.constant 0 : i32
    %c0_i32_0 = arith.constant 0 : i32
    %c0_i32_1 = arith.constant 0 : i32
    return %arg0, %c0_i32, %c0_i32_0 : i32, i32, i32
  }
  func.func @transform_3(%arg0: i32, %arg1: i32, %arg2: i32) -> (i32, i32) {
    %c0_i32 = arith.constant 0 : i32
    %c0_i32_0 = arith.constant 0 : i32
    return %c0_i32, %arg2 : i32, i32
  }
  func.func @transform_4(%arg0: i32, %arg1: i32, %arg2: i32) -> (i32, i32) {
    %c0_i32 = arith.constant 0 : i32
    %c0_i32_0 = arith.constant 0 : i32
    return %c0_i32, %arg2 : i32, i32
  }
  func.func @transform_5(%arg0: i32, %arg1: i32, %arg2: i32) -> (i32, i32) {
    %c0_i32 = arith.constant 0 : i32
    %c0_i32_0 = arith.constant 0 : i32
    %c0_i32_1 = arith.constant 0 : i32
    return %c0_i32, %c0_i32_0 : i32, i32
  }
  func.func @transform_6(%arg0: i32, %arg1: i32, %arg2: i32) -> (i32, i32) {
    %c0_i32 = arith.constant 0 : i32
    %c0_i32_0 = arith.constant 0 : i32
    %c0_i32_1 = arith.constant 0 : i32
    return %c0_i32, %c0_i32_0 : i32, i32
  }
  func.func @transform_7(%arg0: i32, %arg1: i32, %arg2: i32) -> (i32, i32, i32) {
    %c0_i32 = arith.constant 0 : i32
    %c0_i32_0 = arith.constant 0 : i32
    return %arg0, %arg1, %c0_i32 : i32, i32, i32
  }
  func.func @transform_8(%arg0: i32, %arg1: i32, %arg2: i32) -> (i32, i32, i32) {
    %c0_i32 = arith.constant 0 : i32
    %c0_i32_0 = arith.constant 0 : i32
    return %arg0, %arg1, %c0_i32 : i32, i32, i32
  }
}

</mosaic_0001>

<llo_original>
// kernel: tpu_custom_call.1
$region0: #{tpu_custom_call.1}
  #allocation0 [shape = 'u32[]', space=smem, size = 0x4, offset = 0x4, fixed_abs, tag = 'smem constant byte address 0x4 - core index']
  #allocation1 [shape = 'u32[144,128]{1,0:T(1,128)}', space=vmem, size = 0x12000, scoped, tag = 'internal scratch']
  #allocation2 [shape = 'f32[16,1]{1,0:T(8,128)}', space=vmem, size = 0x2000, scoped, tag = 'scratch operand']
  #allocation3 [shape = 'f32[16,1]{1,0:T(8,128)}', space=vmem, size = 0x2000, scoped, tag = 'scratch operand']
  #allocation4 [shape = 'f32[16,1]{1,0:T(8,128)}', space=vmem, size = 0x2000, scoped, tag = 'scratch operand']
  #allocation5 [shape = 'f32[1,16,1]{2,1,0:T(8,128)}', space=vmem, size = 0x2000, scoped, tag = 'scratch operand']
  #allocation6 [shape = 'f32[1,1]{1,0:T(1,128)S(1)}', space=vmem, size = 0x200, scoped, tag = 'scoped memory for tpu_custom_call.1']
  %s0 = inlined_call_operand.hbm [shape: bf16[2,16,32], index: 0, kind: input, shape index: {}]
  %s1 = inlined_call_operand.hbm [shape: bf16[2,16,16], index: 1, kind: input, shape index: {}]
  %s2 = inlined_call_operand.hbm [shape: bf16[2,16,128], index: 2, kind: input, shape index: {}]
  %s3 = inlined_call_operand.hbm [shape: bf16[32,128], index: 3, kind: input, shape index: {}]
  %s4 = inlined_call_operand.vmem [shape: f32[1,128], index: 4, kind: input, shape index: {}]
  %s5 = inlined_call_operand.vmem [shape: f32[1,32], index: 5, kind: input, shape index: {}]
  %s6 = inlined_call_operand.<no memory space> [shape: f32[1,1], index: 6, kind: input, shape index: {}]
  %s7 = inlined_call_operand.hbm [shape: f32[2,16,128], index: 7, kind: output, shape index: {0}]
  %s8 = inlined_call_operand.hbm [shape: f32[2,16,128], index: 8, kind: output, shape index: {1}]
  %9 = xla_tuple %s7, %s8
  %s10 = sld [smem:[#allocation0]]
  $region93: #{tpu_custom_call.1} parent=0
    _
  %s12 = ssub.s32 1, %s10
  %s13 = scalar_select 0, %s12, %s10
  %v14 = vstv %s6
  %15 = vst [vmem:[#allocation6] sm:$0x1] %v14
  $region1: #{tpu_custom_call.1} parent=0
    #allocation7 [shape = 'u8[8192]{0}', space=vmem, size = 0x2000, scoped, tag = 'input window, operand 0']
    #allocation8 [shape = 's32[2]{0}', space=sflag, size = 0x8, scoped, tag = 'scoped memory for tpu_custom_call.1']
    #allocation9 [shape = 's32[2]{0}', space=sflag, size = 0x8, scoped, tag = 'scoped memory for tpu_custom_call.1']
    #allocation10 [shape = 'u8[8192]{0}', space=vmem, size = 0x2000, scoped, tag = 'input window, operand 1']
    #allocation11 [shape = 's32[2]{0}', space=sflag, size = 0x8, scoped, tag = 'scoped memory for tpu_custom_call.1']
    #allocation12 [shape = 'u8[8192]{0}', space=vmem, size = 0x2000, scoped, tag = 'input window, operand 2']
    #allocation13 [shape = 'u8[8192]{0}', space=vmem, size = 0x2000, scoped, tag = 'input window, operand 3, single buffered']
    #allocation14 [shape = 's32[1]{0}', space=sflag, size = 0x4, scoped, tag = 'scoped memory for tpu_custom_call.1']
    #allocation15 [shape = 'u8[16384]{0}', space=vmem, size = 0x4000, scoped, tag = 'output window, operand 0']
    #allocation16 [shape = 'u8[16384]{0}', space=vmem, size = 0x4000, scoped, tag = 'output window, operand 1']
    #allocation17 [shape = 's32[2]{0}', space=sflag, size = 0x8, scoped, tag = 'scoped memory for tpu_custom_call.1']
    %16 = vsyncpa [#allocation8], 0
    %s17 = scalar_lea.sflag [#allocation8], 1
    %18 = vsyncpa %s17, 0
    %19 = vsyncpa [#allocation11], 0
    %s20 = scalar_lea.sflag [#allocation11], 1
    %21 = vsyncpa %s20, 0
    %22 = vsyncpa [#allocation14], 0
    %23 = vsyncpa [#allocation9], 0
    %s24 = scalar_lea.sflag [#allocation9], 1
    %25 = vsyncpa %s24, 0
    %26 = vsyncpa [#allocation17], 0
    %s27 = scalar_lea.sflag [#allocation17], 1
    %28 = vsyncpa %s27, 0
    loop: start=0, step=1, limit=4
    $region2: #{tpu_custom_call.1} parent=1 // loop_pre_header
      _
    $region3: #{tpu_custom_call.1} parent=1 // loop_header
      %s30 = sphi 0, %s34
      %p31 = scmp.ge.s32.totalorder %s30, 4
      %s37 = sphi 0, %s56
      %s38 = sphi 0, %s52
      %s39 = sphi 0, %s48
      %s40 = sphi 0, %s37
      %s41 = sphi 0, %s38
      %s42 = sphi 0, %s39
      %s43 = sphi 0, %s40
      %s44 = sphi 0, %s41
      %s45 = sphi 0, %s42
      %s61 = sphi 0, %s63
      %s64 = sphi 0, %s61
      %s65 = sphi 0, %s64
      %s81 = sphi 0, %s65
      %s89 = sphi 0, %s91
      %s92 = sphi 0, %s89
      %s93 = sphi 0, %s92
      %s109 = sphi 0, %s93
      %s115 = sphi 0, %s117
      %s118 = sphi 0, %s115
      %s119 = sphi 0, %s118
      %s135 = sphi 0, %s119
      %s141 = sphi 0, %s143
      %s144 = sphi 0, %s141
      %s145 = sphi 0, %s144
      %s161 = sphi 0, %s145
      %s167 = sphi 0, %s169
      %s170 = sphi 0, %s167
      %s171 = sphi 0, %s170
      %s187 = sphi 0, %s171
      %s191 = sphi 0, %s191
      %s193 = sphi 0, %s191
      %s194 = sphi 0, %s193
      %s208 = sphi 0, %s194
      %s212 = sphi 0, %s212
      %s214 = sphi 0, %s212
      %s215 = sphi 0, %s214
      %s229 = sphi 0, %s215
      %s237 = sphi 0, %s239
      %s240 = sphi 0, %s237
      %s241 = sphi 0, %s240
      %s257 = sphi 0, %s241
      %s265 = sphi 0, %s267
      %s268 = sphi 0, %s265
      %s269 = sphi 0, %s268
      %s285 = sphi 0, %s269
    $region4: #{tpu_custom_call.1} parent=1 // loop_header_branch
      %33 = sbr.rel (%p31) target = $region8
    $region5: #{tpu_custom_call.1} parent=1 // loop_body
      %s35 = ssub.s32 %s30, 1
      %s36 = ssub.s32 %s30, 2
      %s46 = sadd.s32 1, %s39
      %p47 = scmp.ge.s32.totalorder %s46, 1
      %s48 = scalar_select %p47, 0, %s46
      %s49 = sadd.s32 1, %s38
      %s50 = scalar_select %p47, %s49, %s38
      %p51 = scmp.ge.s32.totalorder %s50, 1
      %s52 = scalar_select %p51, 0, %s50
      %s53 = sadd.s32 1, %s37
      %s54 = scalar_select %p51, %s53, %s37
      %p55 = scmp.ge.s32.totalorder %s54, 2
      %s56 = scalar_select %p55, 0, %s54
      %s57 = ssub.s32 %s37, %s56
      %s58 = ssub.s32 %s38, %s52
      %s59 = sor.u32 %s57, %s58
      %p60 = scmp.eq.s32.totalorder %s59, 0
      %s62 = sadd.s32 %s61, 1
      %s63 = scalar_select %p60, %s61, %s62
      %p66 = pneg %p60
      %p67 = scmp.eq.s32.totalorder %s30, 1
      %p68 = por %p66, %p67
      %p69 = scmp.ne.s32.totalorder %s61, %s64
      %p70 = scmp.eq.s32.totalorder %s30, 0
      %p71 = por %p69, %p70
      %p72 = scmp.ne.s32.totalorder %s61, %s64
      %p73 = scmp.eq.s32.totalorder %s35, 1
      %p74 = por %p72, %p73
      %p75 = scmp.ne.s32.totalorder %s64, %s65
      %p76 = scmp.eq.s32.totalorder %s35, 0
      %p77 = por %p75, %p76
      %p78 = scmp.ne.s32.totalorder %s64, %s65
      %p79 = scmp.eq.s32.totalorder %s36, 1
      %p80 = por %p78, %p79
      %p82 = scmp.ne.s32.totalorder %s65, %s81
      %p83 = scmp.eq.s32.totalorder %s36, 0
      %p84 = por %p82, %p83
      %s85 = ssub.s32 %s37, %s56
      %s86 = ssub.s32 %s38, %s52
      %s87 = sor.u32 %s85, %s86
      %p88 = scmp.eq.s32.totalorder %s87, 0
      %s90 = sadd.s32 %s89, 1
      %s91 = scalar_select %p88, %s89, %s90
      %p94 = pneg %p88
      %p95 = scmp.eq.s32.totalorder %s30, 1
      %p96 = por %p94, %p95
      %p97 = scmp.ne.s32.totalorder %s89, %s92
      %p98 = scmp.eq.s32.totalorder %s30, 0
      %p99 = por %p97, %p98
      %p100 = scmp.ne.s32.totalorder %s89, %s92
      %p101 = scmp.eq.s32.totalorder %s35, 1
      %p102 = por %p100, %p101
      %p103 = scmp.ne.s32.totalorder %s92, %s93
      %p104 = scmp.eq.s32.totalorder %s35, 0
      %p105 = por %p103, %p104
      %p106 = scmp.ne.s32.totalorder %s92, %s93
      %p107 = scmp.eq.s32.totalorder %s36, 1
      %p108 = por %p106, %p107
      %p110 = scmp.ne.s32.totalorder %s93, %s109
      %p111 = scmp.eq.s32.totalorder %s36, 0
      %p112 = por %p110, %p111
      %s113 = ssub.s32 %s37, %s56
      %p114 = scmp.eq.s32.totalorder %s113, 0
      %s116 = sadd.s32 %s115, 1
      %s117 = scalar_select %p114, %s115, %s116
      %p120 = pneg %p114
      %p121 = scmp.eq.s32.totalorder %s30, 1
      %p122 = por %p120, %p121
      %p123 = scmp.ne.s32.totalorder %s115, %s118
      %p124 = scmp.eq.s32.totalorder %s30, 0
      %p125 = por %p123, %p124
      %p126 = scmp.ne.s32.totalorder %s115, %s118
      %p127 = scmp.eq.s32.totalorder %s35, 1
      %p128 = por %p126, %p127
      %p129 = scmp.ne.s32.totalorder %s118, %s119
      %p130 = scmp.eq.s32.totalorder %s35, 0
      %p131 = por %p129, %p130
      %p132 = scmp.ne.s32.totalorder %s118, %s119
      %p133 = scmp.eq.s32.totalorder %s36, 1
      %p134 = por %p132, %p133
      %p136 = scmp.ne.s32.totalorder %s119, %s135
      %p137 = scmp.eq.s32.totalorder %s36, 0
      %p138 = por %p136, %p137
      %s139 = ssub.s32 %s39, %s48
      %p140 = scmp.eq.s32.totalorder %s139, 0
      %s142 = sadd.s32 %s141, 1
      %s143 = scalar_select %p140, %s141, %s142
      %p146 = pneg %p140
      %p147 = scmp.eq.s32.totalorder %s30, 1
      %p148 = por %p146, %p147
      %p149 = scmp.ne.s32.totalorder %s141, %s144
      %p150 = scmp.eq.s32.totalorder %s30, 0
      %p151 = por %p149, %p150
      %p152 = scmp.ne.s32.totalorder %s141, %s144
      %p153 = scmp.eq.s32.totalorder %s35, 1
      %p154 = por %p152, %p153
      %p155 = scmp.ne.s32.totalorder %s144, %s145
      %p156 = scmp.eq.s32.totalorder %s35, 0
      %p157 = por %p155, %p156
      %p158 = scmp.ne.s32.totalorder %s144, %s145
      %p159 = scmp.eq.s32.totalorder %s36, 1
      %p160 = por %p158, %p159
      %p162 = scmp.ne.s32.totalorder %s145, %s161
      %p163 = scmp.eq.s32.totalorder %s36, 0
      %p164 = por %p162, %p163
      %s165 = ssub.s32 %s39, %s48
      %p166 = scmp.eq.s32.totalorder %s165, 0
      %s168 = sadd.s32 %s167, 1
      %s169 = scalar_select %p166, %s167, %s168
      %p172 = pneg %p166
      %p173 = scmp.eq.s32.totalorder %s30, 1
      %p174 = por %p172, %p173
      %p175 = scmp.ne.s32.totalorder %s167, %s170
      %p176 = scmp.eq.s32.totalorder %s30, 0
      %p177 = por %p175, %p176
      %p178 = scmp.ne.s32.totalorder %s167, %s170
      %p179 = scmp.eq.s32.totalorder %s35, 1
      %p180 = por %p178, %p179
      %p181 = scmp.ne.s32.totalorder %s170, %s171
      %p182 = scmp.eq.s32.totalorder %s35, 0
      %p183 = por %p181, %p182
      %p184 = scmp.ne.s32.totalorder %s170, %s171
      %p185 = scmp.eq.s32.totalorder %s36, 1
      %p186 = por %p184, %p185
      %p188 = scmp.ne.s32.totalorder %s171, %s187
      %p189 = scmp.eq.s32.totalorder %s36, 0
      %p190 = por %p188, %p189
      %s192 = sadd.s32 %s191, 1
      %p195 = scmp.eq.s32.totalorder %s30, 1
      %p196 = scmp.ne.s32.totalorder %s191, %s193
      %p197 = scmp.eq.s32.totalorder %s30, 0
      %p198 = por %p196, %p197
      %p199 = scmp.ne.s32.totalorder %s191, %s193
      %p200 = scmp.eq.s32.totalorder %s35, 1
      %p201 = por %p199, %p200
      %p202 = scmp.ne.s32.totalorder %s193, %s194
      %p203 = scmp.eq.s32.totalorder %s35, 0
      %p204 = por %p202, %p203
      %p205 = scmp.ne.s32.totalorder %s193, %s194
      %p206 = scmp.eq.s32.totalorder %s36, 1
      %p207 = por %p205, %p206
      %p209 = scmp.ne.s32.totalorder %s194, %s208
      %p210 = scmp.eq.s32.totalorder %s36, 0
      %p211 = por %p209, %p210
      %s213 = sadd.s32 %s212, 1
      %p216 = scmp.eq.s32.totalorder %s30, 1
      %p217 = scmp.ne.s32.totalorder %s212, %s214
      %p218 = scmp.eq.s32.totalorder %s30, 0
      %p219 = por %p217, %p218
      %p220 = scmp.ne.s32.totalorder %s212, %s214
      %p221 = scmp.eq.s32.totalorder %s35, 1
      %p222 = por %p220, %p221
      %p223 = scmp.ne.s32.totalorder %s214, %s215
      %p224 = scmp.eq.s32.totalorder %s35, 0
      %p225 = por %p223, %p224
      %p226 = scmp.ne.s32.totalorder %s214, %s215
      %p227 = scmp.eq.s32.totalorder %s36, 1
      %p228 = por %p226, %p227
      %p230 = scmp.ne.s32.totalorder %s215, %s229
      %p231 = scmp.eq.s32.totalorder %s36, 0
      %p232 = por %p230, %p231
      %s233 = ssub.s32 %s37, %s56
      %s234 = ssub.s32 %s38, %s52
      %s235 = sor.u32 %s233, %s234
      %p236 = scmp.eq.s32.totalorder %s235, 0
      %s238 = sadd.s32 %s237, 1
      %s239 = scalar_select %p236, %s237, %s238
      %p242 = pneg %p236
      %p243 = scmp.eq.s32.totalorder %s30, 1
      %p244 = por %p242, %p243
      %p245 = scmp.ne.s32.totalorder %s237, %s240
      %p246 = scmp.eq.s32.totalorder %s30, 0
      %p247 = por %p245, %p246
      %p248 = scmp.ne.s32.totalorder %s237, %s240
      %p249 = scmp.eq.s32.totalorder %s35, 1
      %p250 = por %p248, %p249
      %p251 = scmp.ne.s32.totalorder %s240, %s241
      %p252 = scmp.eq.s32.totalorder %s35, 0
      %p253 = por %p251, %p252
      %p254 = scmp.ne.s32.totalorder %s240, %s241
      %p255 = scmp.eq.s32.totalorder %s36, 1
      %p256 = por %p254, %p255
      %p258 = scmp.ne.s32.totalorder %s241, %s257
      %p259 = scmp.eq.s32.totalorder %s36, 0
      %p260 = por %p258, %p259
      %s261 = ssub.s32 %s37, %s56
      %s262 = ssub.s32 %s38, %s52
      %s263 = sor.u32 %s261, %s262
      %p264 = scmp.eq.s32.totalorder %s263, 0
      %s266 = sadd.s32 %s265, 1
      %s267 = scalar_select %p264, %s265, %s266
      %p270 = pneg %p264
      %p271 = scmp.eq.s32.totalorder %s30, 1
      %p272 = por %p270, %p271
      %p273 = scmp.ne.s32.totalorder %s265, %s268
      %p274 = scmp.eq.s32.totalorder %s30, 0
      %p275 = por %p273, %p274
      %p276 = scmp.ne.s32.totalorder %s265, %s268
      %p277 = scmp.eq.s32.totalorder %s35, 1
      %p278 = por %p276, %p277
      %p279 = scmp.ne.s32.totalorder %s268, %s269
      %p280 = scmp.eq.s32.totalorder %s35, 0
      %p281 = por %p279, %p280
      %p282 = scmp.ne.s32.totalorder %s268, %s269
      %p283 = scmp.eq.s32.totalorder %s36, 1
      %p284 = por %p282, %p283
      %p286 = scmp.ne.s32.totalorder %s269, %s285
      %p287 = scmp.eq.s32.totalorder %s36, 0
      %p288 = por %p286, %p287
      %p289 = scmp.le.s32.totalorder 1, %s30
      %p290 = scmp.lt.s32.totalorder %s30, 3
      %p291 = pnand %p289, %p290
      %p292 = pneg %p291
      // Predicated region
      $region9: #{tpu_custom_call.1} parent=5 // pred_check
        _
      $region10: #{tpu_custom_call.1} parent=5 // pred_check_branch
        %294 = sbr.rel (%p291) target = $region12
      $region11: #{tpu_custom_call.1} parent=5 // pred_region
        %s295 = ssub.s32 %s30, 1
        // Predicated region
        $region13: #{tpu_custom_call.1} parent=11 // pred_check
          %p296 = pneg %p157
        $region14: #{tpu_custom_call.1} parent=11 // pred_check_branch
          %298 = sbr.rel (%p296) target = $region16
        $region15: #{tpu_custom_call.1} parent=11 // pred_region
          %s300 = ssub.s32 256, 256
          %301 = vsyncadd [#allocation14], %s300
          %s302 = smul.addr %s42, 64
          %s303 = scalar_lea.hbm %s3, %s302
          %s304 = sshll.u32 [#allocation13], 4
          %s305 = int_to_ptr.vmem [resolvable:$true] %s304
          %310 = dma.hbm_to_vmem [thread:$0]  %s303, 256, %s305, [#allocation14], 64, 64, 4
        $region16: #{tpu_custom_call.1} parent=11 // pred_fallthru
          _
        // Predicated region
        $region17: #{tpu_custom_call.1} parent=11 // pred_check
          %p311 = pneg %p183
        $region18: #{tpu_custom_call.1} parent=11 // pred_check_branch
          %313 = sbr.rel (%p311) target = $region20
        $region19: #{tpu_custom_call.1} parent=11 // pred_region
          %p314 = scmp.lt.s32.totalorder %s42, 0
          %s315 = scalar_select %p314, %s42, 0
          %s316 = scalar_lea.vmem %s4, %s315
        $region20: #{tpu_custom_call.1} parent=11 // pred_fallthru
          _
        // Predicated region
        $region21: #{tpu_custom_call.1} parent=11 // pred_check
          %p317 = pneg %p204
        $region22: #{tpu_custom_call.1} parent=11 // pred_check_branch
          %319 = sbr.rel (%p317) target = $region24
        $region23: #{tpu_custom_call.1} parent=11 // pred_region
          _
        $region24: #{tpu_custom_call.1} parent=11 // pred_fallthru
          _
        // Predicated region
        $region25: #{tpu_custom_call.1} parent=11 // pred_check
          %p320 = pneg %p225
        $region26: #{tpu_custom_call.1} parent=11 // pred_check_branch
          %322 = sbr.rel (%p320) target = $region28
        $region27: #{tpu_custom_call.1} parent=11 // pred_region
          _
        $region28: #{tpu_custom_call.1} parent=11 // pred_fallthru
          _
      $region12: #{tpu_custom_call.1} parent=5 // pred_fallthru
        _
      %p323 = scmp.lt.s32.totalorder %s30, 2
      // Predicated region
      $region29: #{tpu_custom_call.1} parent=5 // pred_check
        %p324 = pneg %p323
      $region30: #{tpu_custom_call.1} parent=5 // pred_check_branch
        %326 = sbr.rel (%p324) target = $region32
      $region31: #{tpu_custom_call.1} parent=5 // pred_region
        // Predicated region
        $region33: #{tpu_custom_call.1} parent=31 // pred_check
          %p327 = pneg %p71
        $region34: #{tpu_custom_call.1} parent=31 // pred_check_branch
          %329 = sbr.rel (%p327) target = $region36
        $region35: #{tpu_custom_call.1} parent=31 // pred_region
          %s330 = sand.u32 %s61, 1
          %s331 = scalar_lea.sflag [#allocation8], %s330
          %s332 = sand.u32 %s61, 1
          %s333 = smul.addr %s332, 8
          %s334 = scalar_lea.vmem [#allocation7], %s333
          %s335 = smul.u32 2, %s38
          %s337 = ssub.s32 128, 128
          %338 = vsyncadd %s331, %s337
          %s339 = smul.addr %s37, 2
          %s340 = sadd.s32 %s335, %s339
          %s341 = smul.addr %s340, 64
          %s342 = scalar_lea.hbm %s0, %s341
          %s343 = sshll.u32 %s334, 4
          %s344 = int_to_ptr.vmem [resolvable:$true] %s343
          %349 = dma.hbm_to_vmem [thread:$0]  %s342, 128, %s344, %s331, 64, 64, 4
        $region36: #{tpu_custom_call.1} parent=31 // pred_fallthru
          _
        // Predicated region
        $region37: #{tpu_custom_call.1} parent=31 // pred_check
          %p350 = pneg %p99
        $region38: #{tpu_custom_call.1} parent=31 // pred_check_branch
          %352 = sbr.rel (%p350) target = $region40
        $region39: #{tpu_custom_call.1} parent=31 // pred_region
          %s353 = sand.u32 %s30, 1
          %s354 = scalar_lea.sflag [#allocation11], %s353
          %s355 = sand.u32 %s89, 1
          %s356 = smul.addr %s355, 8
          %s357 = scalar_lea.vmem [#allocation10], %s356
          %s358 = smul.u32 2, %s38
          %s360 = ssub.s32 128, 128
          %361 = vsyncadd %s354, %s360
          %s362 = smul.addr %s37, 2
          %s363 = sadd.s32 %s358, %s362
          %s364 = smul.addr %s363, 64
          %s365 = scalar_lea.hbm %s1, %s364
          %s366 = sshll.u32 %s357, 4
          %s367 = int_to_ptr.vmem [resolvable:$true] %s366
          %372 = dma.hbm_to_vmem [thread:$0]  %s365, 128, %s367, %s354, 64, 64, 4
        $region40: #{tpu_custom_call.1} parent=31 // pred_fallthru
          _
        // Predicated region
        $region41: #{tpu_custom_call.1} parent=31 // pred_check
          %p373 = pneg %p125
        $region42: #{tpu_custom_call.1} parent=31 // pred_check_branch
          %375 = sbr.rel (%p373) target = $region44
        $region43: #{tpu_custom_call.1} parent=31 // pred_region
          %s376 = sand.u32 %s30, 1
          %s377 = scalar_lea.sflag [#allocation11], %s376
          %s378 = sand.u32 %s115, 1
          %s379 = smul.addr %s378, 8
          %s380 = scalar_lea.vmem [#allocation12], %s379
          %s382 = ssub.s32 128, 128
          %383 = vsyncadd %s377, %s382
          %s384 = smul.addr %s37, 2
          %s385 = smul.addr %s384, 64
          %s386 = scalar_lea.hbm %s2, %s385
          %s387 = sshll.u32 %s380, 4
          %s388 = int_to_ptr.vmem [resolvable:$true] %s387
          %393 = dma.hbm_to_vmem [thread:$0]  %s386, 128, %s388, %s377, 64, 64, 4
        $region44: #{tpu_custom_call.1} parent=31 // pred_fallthru
          _
      $region32: #{tpu_custom_call.1} parent=5 // pred_fallthru
        _
      %p394 = scmp.le.s32.totalorder 1, %s30
      %p395 = scmp.lt.s32.totalorder %s30, 3
      %p396 = pnand %p394, %p395
      %p397 = pneg %p396
      // Predicated region
      $region45: #{tpu_custom_call.1} parent=5 // pred_check
        _
      $region46: #{tpu_custom_call.1} parent=5 // pred_check_branch
        %399 = sbr.rel (%p396) target = $region48
      $region47: #{tpu_custom_call.1} parent=5 // pred_region
        %s400 = ssub.s32 %s30, 1
        %s401 = sand.u32 %s64, 1
        %s402 = scalar_lea.sflag [#allocation8], %s401
        %s403 = sand.u32 %s64, 1
        %s404 = smul.addr %s403, 8
        %s405 = scalar_lea.vmem [#allocation7], %s404
        // Predicated region
        $region49: #{tpu_custom_call.1} parent=47 // pred_check
          %p406 = pneg %p77
        $region50: #{tpu_custom_call.1} parent=47 // pred_check_branch
          %408 = sbr.rel (%p406) target = $region52
        $region51: #{tpu_custom_call.1} parent=47 // pred_region
          %409 = dma.done %s402, 128
        $region52: #{tpu_custom_call.1} parent=47 // pred_fallthru
          _
        %s410 = sand.u32 %s35, 1
        %s411 = scalar_lea.sflag [#allocation11], %s410
        %s412 = sand.u32 %s92, 1
        %s413 = smul.addr %s412, 8
        %s414 = scalar_lea.vmem [#allocation10], %s413
        // Predicated region
        $region53: #{tpu_custom_call.1} parent=47 // pred_check
          %p415 = pneg %p105
        $region54: #{tpu_custom_call.1} parent=47 // pred_check_branch
          %417 = sbr.rel (%p415) target = $region56
        $region55: #{tpu_custom_call.1} parent=47 // pred_region
          %418 = dma.done %s411, 128
        $region56: #{tpu_custom_call.1} parent=47 // pred_fallthru
          _
        %s419 = sand.u32 %s35, 1
        %s420 = scalar_lea.sflag [#allocation11], %s419
        %s421 = sand.u32 %s118, 1
        %s422 = smul.addr %s421, 8
        %s423 = scalar_lea.vmem [#allocation12], %s422
        // Predicated region
        $region57: #{tpu_custom_call.1} parent=47 // pred_check
          %p424 = pneg %p131
        $region58: #{tpu_custom_call.1} parent=47 // pred_check_branch
          %426 = sbr.rel (%p424) target = $region60
        $region59: #{tpu_custom_call.1} parent=47 // pred_region
          %427 = dma.done %s420, 128
        $region60: #{tpu_custom_call.1} parent=47 // pred_fallthru
          _
        // Predicated region
        $region61: #{tpu_custom_call.1} parent=47 // pred_check
          %p428 = pneg %p157
        $region62: #{tpu_custom_call.1} parent=47 // pred_check_branch
          %430 = sbr.rel (%p428) target = $region64
        $region63: #{tpu_custom_call.1} parent=47 // pred_region
          %431 = dma.done [#allocation14], 256
        $region64: #{tpu_custom_call.1} parent=47 // pred_fallthru
          _
        %s432 = sand.u32 %s64, 1
        %s433 = scalar_lea.sflag [#allocation8], %s432
        %s434 = sand.u32 %s64, 1
        %s435 = smul.addr %s434, 8
        %s436 = scalar_lea.vmem [#allocation7], %s435
        %p437 = pneg %p77
        %p438 = pneg %p74
        %s439 = sand.u32 %s35, 1
        %s440 = scalar_lea.sflag [#allocation11], %s439
        %s441 = sand.u32 %s92, 1
        %s442 = smul.addr %s441, 8
        %s443 = scalar_lea.vmem [#allocation10], %s442
        %p444 = pneg %p105
        %p445 = pneg %p102
        %s446 = sand.u32 %s35, 1
        %s447 = scalar_lea.sflag [#allocation11], %s446
        %s448 = sand.u32 %s118, 1
        %s449 = smul.addr %s448, 8
        %s450 = scalar_lea.vmem [#allocation12], %s449
        %p451 = pneg %p131
        %p452 = pneg %p128
        %p453 = pneg %p157
        %p454 = pneg %p154
        %p455 = scmp.lt.s32.totalorder %s42, 0
        %s456 = scalar_select %p455, %s42, 0
        %s457 = scalar_lea.vmem %s4, %s456
        %p458 = pneg %p183
        %p459 = pneg %p180
        %p460 = pneg %p204
        %p461 = pneg %p201
        %p462 = pneg %p225
        %p463 = pneg %p222
        %p464 = pneg %p253
        %p465 = pneg %p250
        %s466 = sand.u32 %s240, 1
        %s467 = scalar_lea.sflag [#allocation9], %s466
        %s468 = sand.u32 %s240, 1
        %s469 = smul.addr %s468, 16
        %s470 = scalar_lea.vmem [#allocation15], %s469
        %p471 = pneg %p281
        %p472 = pneg %p278
        %s473 = sand.u32 %s268, 1
        %s474 = scalar_lea.sflag [#allocation17], %s473
        %s475 = sand.u32 %s268, 1
        %s476 = smul.addr %s475, 16
        %s477 = scalar_lea.vmem [#allocation16], %s476
        %s478 = smul.u32 2, %s41
        %s479 = smul.u32 2, %s41
        %p480 = scmp.lt.s32.totalorder %s42, 0
        %s481 = scalar_select %p480, %s42, 0
        %s482 = scalar_lea.vmem %s4, %s481
        %s483 = smul.u32 2, %s41
        %s484 = smul.u32 2, %s41
        %v486 = vld [vmem:[%s405] sm:$0xf]
        %v487 = vld [vmem:[%s405 + $0x4] sm:$0xf]
        %p488 = scmp.eq.s32.totalorder %s42, 0
        // Predicated region
        $region65: #{tpu_custom_call.1} parent=47 // pred_check
          %p489 = pneg %p488
        $region66: #{tpu_custom_call.1} parent=47 // pred_check_branch
          %491 = sbr.rel (%p489) target = $region68
        $region67: #{tpu_custom_call.1} parent=47 // pred_region
          %vm492 = vcmask 7168
          %493 = vst.msk [vmem:[#allocation2] sm:$0xff] %vm492, -inf
          %494 = vst.msk [vmem:[#allocation2 + $0x8] sm:$0xff] %vm492, -inf
          %495 = vst.msk [vmem:[#allocation3] sm:$0xff] %vm492, 0.0
          %496 = vst.msk [vmem:[#allocation3 + $0x8] sm:$0xff] %vm492, 0.0
          %v497 = vunpack.c.l.bf16 %v486
          %v498 = vunpack.c.l.bf16 %v487
          %v499 = vld [vmem:[%s5] sm:$0x1]
          %v501 = vlaneseq
          %v502 = vshrl.u32 %v501, 7
          %v503 = vsub.s32 0, %v502
          %v504 = vrot.slane %v499, %v503
          %v506 = vmul.f32 %v497, %v504
          %v507 = vmul.f32 %v498, %v504
          %vm508 = vcmask 261120
          %v509 = vsel %vm508, %v506, 0.0
          %510 = vadd.xlane.f32.xlu0 %v509
          %v511 = vpop.xlane.xlu0 %510
          %v512 = vsel %vm508, %v507, 0.0
          %513 = vadd.xlane.f32.xlu0 %v512
          %v514 = vpop.xlane.xlu0 %513
          %v515 = vld [vmem:[#allocation6] sm:$0x1]
          %v517 = vlaneseq
          %v518 = vshrl.u32 %v517, 7
          %v519 = vsub.s32 0, %v518
          %v520 = vrot.slane %v515, %v519
          %v522 = vadd.f32 %v511, %v520
          %v523 = vadd.f32 %v514, %v520
          %v524 = vxor.u32 %v522, 2147483648
          %v525 = vxor.u32 %v523, 2147483648
          %v526 = vmul.f32 %v524, 1.442695
          %v527 = vpow.pop %v526
          %v528 = vmul.f32 %v525, 1.442695
          %v529 = vpow.pop %v528
          %v530 = vadd.f32 %v527, 1.0
          %v531 = vadd.f32 %v529, 1.0
          %v532 = vrcp.pop %v530
          %v533 = vmul.f32 1.0, %v532
          %v534 = vrcp.pop %v531
          %v535 = vmul.f32 1.0, %v534
          %536 = vst.msk [vmem:[#allocation4] sm:$0xff] %vm492, %v533
          %537 = vst.msk [vmem:[#allocation4 + $0x8] sm:$0xff] %vm492, %v535
          %v538 = vld [vmem:[%s414] sm:$0xf]
          %v539 = vld [vmem:[%s414 + $0x4] sm:$0xf]
          %v540 = vld [vmem:[%s423] sm:$0xf]
          %v541 = vld [vmem:[%s423 + $0x4] sm:$0xf]
          %v544 = vunpack.c.l.b16 %v538
          %v545 = vunpack.c.l.b16 %v539
          %v546 = vpack.c.b16 %v545, %v544
          %v549 = vunpack.c.l.b16 %v540
          %v550 = vunpack.c.l.b16 %v541
          %v551 = vpack.c.b16 %v550, %v549
          %vm553 = vcmask 130048
          %v555 = vsel %vm553, %v546, 0
          %557 = vmatprep.subr.bf16.mxu0 0
          %558 = vmatpush1.bf16.msra.mxu0 %v551
          %559 = vmatprep.subr.bf16.mxu0 0
          %560 = vmatpush1.bf16.msra.mxu0 0
          %561 = vmatprep.subr.bf16.mxu0 0
          %562 = vmatpush1.bf16.msra.mxu0 0
          %563 = vmatprep.subr.bf16.mxu0 0
          %564 = vmatpush1.bf16.msra.mxu0 0
          %565 = vmatprep.subr.bf16.mxu0 0
          %566 = vmatpush1.bf16.msra.mxu0 0
          %567 = vmatprep.subr.bf16.mxu0 0
          %568 = vmatpush1.bf16.msra.mxu0 0
          %569 = vmatprep.subr.bf16.mxu0 0
          %570 = vmatpush1.bf16.msra.mxu0 0
          %571 = vmatprep.subr.bf16.mxu0 0
          %572 = vmatpush1.bf16.msra.mxu0 0
          %573 = vmatprep.subr.bf16.mxu0 0
          %574 = vmatpush1.bf16.msra.mxu0 0
          %575 = vmatprep.subr.bf16.mxu0 0
          %576 = vmatpush1.bf16.msra.mxu0 0
          %577 = vmatprep.subr.bf16.mxu0 0
          %578 = vmatpush1.bf16.msra.mxu0 0
          %579 = vmatprep.subr.bf16.mxu0 0
          %580 = vmatpush1.bf16.msra.mxu0 0
          %581 = vmatprep.subr.bf16.mxu0 0
          %582 = vmatpush1.bf16.msra.mxu0 0
          %583 = vmatprep.subr.bf16.mxu0 0
          %584 = vmatpush1.bf16.msra.mxu0 0
          %585 = vmatprep.subr.bf16.mxu0 0
          %586 = vmatpush1.bf16.msra.mxu0 0
          %587 = vmatprep.subr.bf16.mxu0 0
          %588 = vmatpush1.bf16.msra.mxu0 0
          %589 = vmatprep.mubr.bf16.mxu0 0
          %590 = vmatmul.mubr.bf16.gmra.mrb[0].mxu0 %v555
          %v591 = vpop.f32.mrb[0].mxu0
          %v592 = vadd.f32 0.0, %v591
          %v593 = vpop.f32.mrb[0].mxu0
          %v594 = vpop.f32.mrb[0].mxu0
          %v595 = vadd.f32 0.0, %v594
          %v596 = vpop.f32.mrb[0].mxu0
          %597 = vdwg.mxu0
          %599 = vset.pattern.permute.xlu0 0
          %600 = vperm.xlu0 %599, %v533
          %v601 = vpop.permute.xlu0 %600
          %604 = vset.pattern.permute.xlu0 0
          %605 = vperm.xlu0 %604, %v535
          %v606 = vpop.permute.xlu0 %605
          %v608 = vmul.f32 %v592, %v601
          %v609 = vmul.f32 %v595, %v606
          %610 = vst [vmem:[%s477] sm:$0xff] %v608
          %611 = vst [vmem:[%s477 + $0x8] sm:$0xff] %v609
        $region68: #{tpu_custom_call.1} parent=47 // pred_fallthru
          _
        %v612 = vld [vmem:[#allocation13] sm:$0xf]
        %v613 = vld [vmem:[#allocation13 + $0x4] sm:$0xf]
        %v614 = vld [vmem:[#allocation13 + $0x8] sm:$0xf]
        %v615 = vld [vmem:[#allocation13 + $0xc] sm:$0xf]
        %v616 = vld [vmem:[%s482] sm:$0x1]
        %v618 = vlaneseq
        %v619 = vshrl.u32 %v618, 7
        %v620 = vsub.s32 0, %v619
        %v621 = vrot.slane %v616, %v620
        %v625 = vunpack.c.l.b16 %v486
        %v626 = vunpack.c.l.b16 %v487
        %v627 = vpack.c.b16 %v626, %v625
        %v632 = vunpack.c.l.b16 %v612
        %v633 = vunpack.c.l.b16 %v613
        %v634 = vunpack.c.l.b16 %v614
        %v635 = vunpack.c.l.b16 %v615
        %v636 = vpack.c.b16 %v633, %v632
        %v637 = vpack.c.b16 %v635, %v634
        %vm640 = vcmask 261120
        %v642 = vsel %vm640, %v627, 0
        %644 = vmatprep.subr.bf16.mxu0 0
        %645 = vmatpush1.bf16.msra.mxu0 %v636
        %646 = vmatprep.subr.bf16.mxu0 0
        %647 = vmatpush1.bf16.msra.mxu0 %v637
        %648 = vmatprep.subr.bf16.mxu0 0
        %649 = vmatpush1.bf16.msra.mxu0 0
        %650 = vmatprep.subr.bf16.mxu0 0
        %651 = vmatpush1.bf16.msra.mxu0 0
        %652 = vmatprep.subr.bf16.mxu0 0
        %653 = vmatpush1.bf16.msra.mxu0 0
        %654 = vmatprep.subr.bf16.mxu0 0
        %655 = vmatpush1.bf16.msra.mxu0 0
        %656 = vmatprep.subr.bf16.mxu0 0
        %657 = vmatpush1.bf16.msra.mxu0 0
        %658 = vmatprep.subr.bf16.mxu0 0
        %659 = vmatpush1.bf16.msra.mxu0 0
        %660 = vmatprep.subr.bf16.mxu0 0
        %661 = vmatpush1.bf16.msra.mxu0 0
        %662 = vmatprep.subr.bf16.mxu0 0
        %663 = vmatpush1.bf16.msra.mxu0 0
        %664 = vmatprep.subr.bf16.mxu0 0
        %665 = vmatpush1.bf16.msra.mxu0 0
        %666 = vmatprep.subr.bf16.mxu0 0
        %667 = vmatpush1.bf16.msra.mxu0 0
        %668 = vmatprep.subr.bf16.mxu0 0
        %669 = vmatpush1.bf16.msra.mxu0 0
        %670 = vmatprep.subr.bf16.mxu0 0
        %671 = vmatpush1.bf16.msra.mxu0 0
        %672 = vmatprep.subr.bf16.mxu0 0
        %673 = vmatpush1.bf16.msra.mxu0 0
        %674 = vmatprep.subr.bf16.mxu0 0
        %675 = vmatpush1.bf16.msra.mxu0 0
        %676 = vmatprep.mubr.bf16.mxu0 0
        %677 = vmatmul.mubr.bf16.gmra.mrb[0].mxu0 %v642
        %v678 = vpop.f32.mrb[0].mxu0
        %v679 = vadd.f32 %v621, %v678
        %v680 = vpop.f32.mrb[0].mxu0
        %v681 = vpop.f32.mrb[0].mxu0
        %v682 = vadd.f32 %v621, %v681
        %v683 = vpop.f32.mrb[0].mxu0
        %684 = vdwg.mxu0
        %685 = vmax.xlane.f32.xlu0 %v679
        %v686 = vpop.xlane.xlu0 %685
        %687 = vmax.xlane.f32.xlu0 %v682
        %v688 = vpop.xlane.xlu0 %687
        %v689 = vsub.f32 %v679, %v686
        %v690 = vsub.f32 %v682, %v688
        %v691 = vmul.f32 %v689, 1.442695
        %v692 = vpow.pop %v691
        %v693 = vmul.f32 %v690, 1.442695
        %v694 = vpow.pop %v693
        %695 = vadd.xlane.f32.xlu0 %v692
        %v696 = vpop.xlane.xlu0 %695
        %697 = vadd.xlane.f32.xlu0 %v694
        %v698 = vpop.xlane.xlu0 %697
        %s699 = smul.u32 %s42, 128
        %s700 = sshra.s32 %s699, 7
        %s701 = sand.u32 %s699, 127
        %s702 = scalar_lea.vmem %s470, %s700 [#allocation15]
        %703 = vst [vmem:[%s702] sm:$0xff] %v692
        %704 = vst [vmem:[%s702 + $0x8] sm:$0xff] %v694
        %s705 = smul.u32 %s42, 16
        %s706 = scalar_lea.vmem [#allocation5], %s705
        %vm707 = vcmask 7168
        %708 = vst.msk [vmem:[%s706] sm:$0xff] %vm707, %v686
        %709 = vst.msk [vmem:[%s706 + $0x8] sm:$0xff] %vm707, %v688
        %v710 = vld [vmem:[#allocation2] sm:$0xff]
        %v711 = vld [vmem:[#allocation2 + $0x8] sm:$0xff]
        %v712 = vmax.f32 %v710, %v686
        %v713 = vmax.f32 %v711, %v688
        %v714 = vld [vmem:[#allocation3] sm:$0xff]
        %v715 = vld [vmem:[#allocation3 + $0x8] sm:$0xff]
        %v716 = vsub.f32 %v710, %v712
        %v717 = vsub.f32 %v711, %v713
        %v718 = vmul.f32 %v716, 1.442695
        %v719 = vpow.pop %v718
        %v720 = vmul.f32 %v717, 1.442695
        %v721 = vpow.pop %v720
        %v722 = vmul.f32 %v714, %v719
        %v723 = vmul.f32 %v715, %v721
        %v724 = vsub.f32 %v686, %v712
        %v725 = vsub.f32 %v688, %v713
        %v726 = vmul.f32 %v724, 1.442695
        %v727 = vpow.pop %v726
        %v728 = vmul.f32 %v725, 1.442695
        %v729 = vpow.pop %v728
        %v730 = vmul.f32 %v696, %v727
        %v731 = vmul.f32 %v698, %v729
        %v732 = vadd.f32 %v722, %v730
        %v733 = vadd.f32 %v723, %v731
        %734 = vst.msk [vmem:[#allocation3] sm:$0xff] %vm707, %v732
        %735 = vst.msk [vmem:[#allocation3 + $0x8] sm:$0xff] %vm707, %v733
        %736 = vst.msk [vmem:[#allocation2] sm:$0xff] %vm707, %v712
        %737 = vst.msk [vmem:[#allocation2 + $0x8] sm:$0xff] %vm707, %v713
        // Predicated region
        $region69: #{tpu_custom_call.1} parent=47 // pred_check
          %p738 = pneg %p488
        $region70: #{tpu_custom_call.1} parent=47 // pred_check_branch
          %740 = sbr.rel (%p738) target = $region72
        $region71: #{tpu_custom_call.1} parent=47 // pred_region
          %v741 = vld [vmem:[#allocation2] sm:$0xff]
          %v742 = vld [vmem:[#allocation2 + $0x8] sm:$0xff]
          %v743 = vld [vmem:[#allocation3] sm:$0xff]
          %v744 = vld [vmem:[#allocation3 + $0x8] sm:$0xff]
          %v745 = vrcp.pop %v743
          %v746 = vrcp.pop %v744
          %v747 = vld [vmem:[#allocation4] sm:$0xff]
          %v748 = vld [vmem:[#allocation4 + $0x8] sm:$0xff]
          %v749 = vsub.f32 1.0, %v747
          %v750 = vsub.f32 1.0, %v748
          %v751 = vmul.f32 %v745, %v749
          %v752 = vmul.f32 %v746, %v750
          %v753 = vld [vmem:[#allocation5] sm:$0xff]
          %v754 = vld [vmem:[#allocation5 + $0x8] sm:$0xff]
          %v755 = vsub.f32 %v753, %v741
          %v756 = vsub.f32 %v754, %v742
          %v757 = vmul.f32 %v755, 1.442695
          %v758 = vpow.pop %v757
          %v759 = vmul.f32 %v756, 1.442695
          %v760 = vpow.pop %v759
          %v761 = vmul.f32 %v758, %v751
          %v762 = vmul.f32 %v760, %v752
          %v763 = vld [vmem:[%s470] sm:$0xff]
          %v764 = vld [vmem:[%s470 + $0x8] sm:$0xff]
          %766 = vset.pattern.permute.xlu0 0
          %767 = vperm.xlu0 %766, %v761
          %v768 = vpop.permute.xlu0 %767
          %771 = vset.pattern.permute.xlu0 0
          %772 = vperm.xlu0 %771, %v762
          %v773 = vpop.permute.xlu0 %772
          %v775 = vmul.f32 %v763, %v768
          %v776 = vmul.f32 %v764, %v773
          %777 = vst [vmem:[%s470] sm:$0xff] %v775
          %778 = vst [vmem:[%s470 + $0x8] sm:$0xff] %v776
        $region72: #{tpu_custom_call.1} parent=47 // pred_fallthru
          _
        %s779 = sand.u32 %s240, 1
        %s780 = scalar_lea.sflag [#allocation9], %s779
        %s781 = sand.u32 %s240, 1
        %s782 = smul.addr %s781, 16
        %s783 = scalar_lea.vmem [#allocation15], %s782
        %s784 = sand.u32 %s268, 1
        %s785 = scalar_lea.sflag [#allocation17], %s784
        %s786 = sand.u32 %s268, 1
        %s787 = smul.addr %s786, 16
        %s788 = scalar_lea.vmem [#allocation16], %s787
        // Predicated region
        $region73: #{tpu_custom_call.1} parent=47 // pred_check
          %p789 = pneg %p250
        $region74: #{tpu_custom_call.1} parent=47 // pred_check_branch
          %791 = sbr.rel (%p789) target = $region76
        $region75: #{tpu_custom_call.1} parent=47 // pred_region
          %s792 = smul.u32 2, %s41
          %s794 = ssub.s32 256, 256
          %795 = vsyncadd %s780, %s794
          %s796 = smul.addr %s40, 2
          %s797 = sadd.s32 %s792, %s796
          %s798 = smul.addr %s797, 128
          %s799 = scalar_lea.hbm %s7, %s798
          %s800 = sshll.u32 %s783, 4
          %s801 = int_to_ptr.vmem [resolvable:$true] %s800
          %806 = dma.vmem_to_hbm [thread:$0]  %s801, 256, %s799, %s780, 128, 128, 8
        $region76: #{tpu_custom_call.1} parent=47 // pred_fallthru
          _
        // Predicated region
        $region77: #{tpu_custom_call.1} parent=47 // pred_check
          %p807 = pneg %p278
        $region78: #{tpu_custom_call.1} parent=47 // pred_check_branch
          %809 = sbr.rel (%p807) target = $region80
        $region79: #{tpu_custom_call.1} parent=47 // pred_region
          %s810 = smul.u32 2, %s41
          %s812 = ssub.s32 256, 256
          %813 = vsyncadd %s785, %s812
          %s814 = smul.addr %s40, 2
          %s815 = sadd.s32 %s810, %s814
          %s816 = smul.addr %s815, 128
          %s817 = scalar_lea.hbm %s8, %s816
          %s818 = sshll.u32 %s788, 4
          %s819 = int_to_ptr.vmem [resolvable:$true] %s818
          %824 = dma.vmem_to_hbm [thread:$0]  %s819, 256, %s817, %s785, 128, 128, 8
        $region80: #{tpu_custom_call.1} parent=47 // pred_fallthru
          _
      $region48: #{tpu_custom_call.1} parent=5 // pred_fallthru
        _
      %p825 = scmp.le.s32.totalorder 2, %s30
      // Predicated region
      $region81: #{tpu_custom_call.1} parent=5 // pred_check
        %p826 = pneg %p825
      $region82: #{tpu_custom_call.1} parent=5 // pred_check_branch
        %828 = sbr.rel (%p826) target = $region84
      $region83: #{tpu_custom_call.1} parent=5 // pred_region
        %s829 = ssub.s32 %s30, 2
        // Predicated region
        $region85: #{tpu_custom_call.1} parent=83 // pred_check
          %p830 = pneg %p256
        $region86: #{tpu_custom_call.1} parent=83 // pred_check_branch
          %832 = sbr.rel (%p830) target = $region88
        $region87: #{tpu_custom_call.1} parent=83 // pred_region
          %s833 = sand.u32 %s241, 1
          %s834 = scalar_lea.sflag [#allocation9], %s833
          %s835 = sand.u32 %s241, 1
          %s836 = smul.addr %s835, 16
          %s837 = scalar_lea.vmem [#allocation15], %s836
          %838 = dma.done %s834, 256
        $region88: #{tpu_custom_call.1} parent=83 // pred_fallthru
          _
        // Predicated region
        $region89: #{tpu_custom_call.1} parent=83 // pred_check
          %p839 = pneg %p284
        $region90: #{tpu_custom_call.1} parent=83 // pred_check_branch
          %841 = sbr.rel (%p839) target = $region92
        $region91: #{tpu_custom_call.1} parent=83 // pred_region
          %s842 = sand.u32 %s269, 1
          %s843 = scalar_lea.sflag [#allocation17], %s842
          %s844 = sand.u32 %s269, 1
          %s845 = smul.addr %s844, 16
          %s846 = scalar_lea.vmem [#allocation16], %s845
          %847 = dma.done %s843, 256
        $region92: #{tpu_custom_call.1} parent=83 // pred_fallthru
          _
      $region84: #{tpu_custom_call.1} parent=5 // pred_fallthru
        _
    $region6: #{tpu_custom_call.1} parent=1 // loop_footer
      %s34 = sadd.s32 1, %s30
    $region7: #{tpu_custom_call.1} parent=1 // loop_footer_branch
      %29 = sbr.rel target = $region3
    $region8: #{tpu_custom_call.1} parent=1 // loop_exit
      _
    %848 = vsyncpa [#allocation8], 1
    %s849 = scalar_lea.sflag [#allocation8], 1
    %850 = vsyncpa %s849, 1
    %851 = vsyncpa [#allocation11], 1
    %s852 = scalar_lea.sflag [#allocation11], 1
    %853 = vsyncpa %s852, 1
    %854 = vsyncpa [#allocation14], 1
    %855 = vsyncpa [#allocation9], 1
    %s856 = scalar_lea.sflag [#allocation9], 1
    %857 = vsyncpa %s856, 1
    %858 = vsyncpa [#allocation17], 1
    %s859 = scalar_lea.sflag [#allocation17], 1
    %860 = vsyncpa %s859, 1

</llo_original>
